<compile_context>
chip_gen: v6e
topology: v6e:2x2x1
jax: 0.10.0
libtpu: 0.0.40
codegen_flags: <defaults>
</compile_context>

<pallas_src>
import functools

import jax
import jax.numpy as jnp
from jax import lax
from jax.experimental import pallas as pl
from jax.experimental.pallas import tpu as pltpu


def _round_up(x, m):
    return (x + m - 1) // m * m


def _const2(shape):
    """BlockSpec for a small weight kept resident (constant block index)."""
    return pl.BlockSpec(shape, lambda i, j: (0, 0))


# ---------------------------------------------------------------------------
# Kernel A1: per-topic logsumexp of (alpha @ rho^T), online over vocab tiles.
# ---------------------------------------------------------------------------
def _beta_stats_kernel(alpha_ref, rho_t_ref, lse_ref, m_sc, l_sc, *,
                       vocab_size, vocab_tile):
    j = pl.program_id(0)

    @pl.when(j == 0)
    def _init():
        m_sc[...] = jnp.full_like(m_sc, -1e30)
        l_sc[...] = jnp.zeros_like(l_sc)

    # native bf16 MXU matmul, f32 accumulation
    logits = jnp.dot(alpha_ref[...], rho_t_ref[...],
                     preferred_element_type=jnp.float32)            # (Kp, tv)
    col = j * vocab_tile + lax.broadcasted_iota(jnp.int32, logits.shape, 1)
    logits = jnp.where(col < vocab_size, logits, -1e30)              # mask pad V

    m_new = jnp.maximum(m_sc[...], jnp.max(logits, axis=-1, keepdims=True))
    l_sc[...] = (l_sc[...] * jnp.exp(m_sc[...] - m_new)
                 + jnp.sum(jnp.exp(logits - m_new), axis=-1, keepdims=True))
    m_sc[...] = m_new

    @pl.when(j == pl.num_programs(0) - 1)
    def _fin():
        lse_ref[...] = m_sc[...] + jnp.log(l_sc[...])


# ---------------------------------------------------------------------------
# Kernel A2: beta tile = exp(alpha @ rho^T - lse), stored bf16.
# ---------------------------------------------------------------------------
def _beta_kernel(alpha_ref, rho_t_ref, lse_ref, beta_ref, *,
                 vocab_size, vocab_tile):
    j = pl.program_id(0)
    logits = jnp.dot(alpha_ref[...], rho_t_ref[...],
                     preferred_element_type=jnp.float32)             # (Kp, tv)
    col = j * vocab_tile + lax.broadcasted_iota(jnp.int32, logits.shape, 1)
    logits = jnp.where(col < vocab_size, logits, -1e30)
    beta_ref[...] = jnp.exp(logits - lse_ref[...]).astype(beta_ref.dtype)


# ---------------------------------------------------------------------------
# Kernel B: encoder.  grid = (batch_tiles, vocab_tiles); vocab is a reduction.
# ---------------------------------------------------------------------------
def _encoder_kernel(bows_ref, w0_ref, b0_ref, w2_ref, b2_ref,
                    wmulv_ref, bmulv_ref,
                    theta_ref, kl_ref, acc_ref, rs_ref, *, num_topics, kp):
    j = pl.program_id(1)

    @pl.when(j == 0)
    def _init():
        acc_ref[...] = jnp.zeros_like(acc_ref)
        rs_ref[...] = jnp.zeros_like(rs_ref)

    bows = bows_ref[...]                                             # (tb, tv) bf16
    rs_ref[...] += jnp.sum(bows.astype(jnp.float32), axis=1, keepdims=True)
    # bow-normalization folded in later via a (tb,1) reciprocal scale;
    # bf16 x bf16 MXU matmul with f32 accumulation.
    acc_ref[...] += jnp.dot(bows, w0_ref[...],
                            preferred_element_type=jnp.float32)

    @pl.when(j == pl.num_programs(1) - 1)
    def _finalize():
        row_sum = rs_ref[...]
        inv = pl.reciprocal(jnp.where(row_sum > 0.0, row_sum, 1.0))
        h1 = jnp.tanh(inv * acc_ref[...] + b0_ref[...])
        h2 = jnp.tanh(jnp.dot(h1, w2_ref[...],
                              preferred_element_type=jnp.float32) + b2_ref[...])
        # fused mu / logvar head: one (tb,H) @ (H, 2*Kp) matmul
        mulv = jnp.dot(h2, wmulv_ref[...],
                       preferred_element_type=jnp.float32) + bmulv_ref[...]
        mu = mulv[:, :kp]
        lv = mulv[:, kp:]

        col = lax.broadcasted_iota(jnp.int32, mu.shape, 1)
        valid = col < num_topics                                     # mask pad K

        # theta = softmax over topics of mu  (swapped-unpack semantics)
        mu_m = jnp.where(valid, mu, -1e30)
        t = mu_m - jnp.max(mu_m, axis=-1, keepdims=True)
        et = jnp.where(valid, jnp.exp(t), 0.0)
        inv_s = pl.reciprocal(jnp.sum(et, axis=-1, keepdims=True), approx=True)
        theta_ref[...] = (et * inv_s).astype(theta_ref.dtype)        # bf16 out

        # kl_normal_normal(mu_theta=logvar, logvar_theta=mu)  (bug-for-bug)
        kl_terms = jnp.where(valid, 1.0 + mu - lv * lv - jnp.exp(mu), 0.0)
        kl_ref[...] = -0.5 * jnp.sum(kl_terms, axis=1, keepdims=True)


# ---------------------------------------------------------------------------
# Kernel C: decode + NLL.  grid = (batch_tiles, vocab_tiles).
# ---------------------------------------------------------------------------
def _decode_body(theta_ref, beta_ref, bows_ref, nll_ref, res_ref, nll_acc,
                 *, bf16_log):
    j = pl.program_id(1)

    @pl.when(j == 0)
    def _init():
        nll_acc[...] = jnp.zeros_like(nll_acc)

    # bf16 x bf16 MXU matmul, f32 accumulation
    res = jnp.dot(theta_ref[...], beta_ref[...],
                  preferred_element_type=jnp.float32) + 1e-10        # (tb, tv)
    if res_ref is not None:
        res_ref[...] = res

    bows = bows_ref[...]                                             # bf16
    if bf16_log:
        # bf16 EUP log on v6e/v7x; sum still accumulates in f32.
        prod = jnp.log(res.astype(jnp.bfloat16)) * bows
    else:
        prod = jnp.log(res) * bows.astype(jnp.float32)
    nll_acc[...] += -jnp.sum(prod.astype(jnp.float32), axis=1, keepdims=True)

    @pl.when(j == pl.num_programs(1) - 1)
    def _fin():
        nll_ref[...] = nll_acc[...]


def _decode_kernel(theta_ref, beta_ref, bows_ref, res_ref, nll_ref, nll_acc,
                   *, bf16_log):
    _decode_body(theta_ref, beta_ref, bows_ref, nll_ref, res_ref, nll_acc,
                 bf16_log=bf16_log)


def _decode_kernel_no_res(theta_ref, beta_ref, bows_ref, nll_ref, nll_acc,
                          *, bf16_log):
    _decode_body(theta_ref, beta_ref, bows_ref, nll_ref, None, nll_acc,
                 bf16_log=bf16_log)


# ---------------------------------------------------------------------------
# Wrapper
# ---------------------------------------------------------------------------
def etm_forward(bows, params, *, batch_tile=None, vocab_tile=None,
                weights_dtype=jnp.bfloat16, return_res=True, bf16_log=True):
    """Pallas ETM forward.  Returns (neg_elbo, nll, kl, res_or_None).

    NOTE: bows is carried in bf16 -- exact only for integer counts <= 256.
    Set bf16_log=False on v5e (no bf16 EUP) or for tighter NLL accuracy.
    """
    bows_f32 = bows.astype(jnp.float32)
    B, V = bows.shape
    H = params["q0_w"].shape[0]
    K, E = params["alpha_w"].shape

    Kp = _round_up(K, 128)                            # lane-dense topic dim
    tb = batch_tile or min(256, _round_up(B, 8))
    tv = vocab_tile or min(1024, _round_up(V, 128))
    Bp, Vp = _round_up(B, tb), _round_up(V, tv)
    nb, nv = Bp // tb, Vp // tv

    def pad2(a, r, c):
        return jnp.pad(a, ((0, r - a.shape[0]), (0, c - a.shape[1])))

    bows_p = pad2(bows_f32, Bp, Vp).astype(jnp.bfloat16)            # (Bp, Vp)
    # large weights: pre-transpose (out,in)->(in,out), cast to bf16
    w0t = pad2(params["q0_w"].T, Vp, H).astype(weights_dtype)       # (Vp, H)
    rho_t = pad2(params["rho_w"].T, E, Vp).astype(weights_dtype)    # (E, Vp)
    alpha_p = pad2(params["alpha_w"], Kp, E).astype(weights_dtype)  # (Kp, E)
    # small weights stay f32 (encoder finalize runs once per batch tile)
    w2t = params["q2_w"].T                                          # (H, H)
    wmulv = jnp.concatenate([pad2(params["mu_w"].T, H, Kp),
                             pad2(params["lv_w"].T, H, Kp)], axis=1)  # (H, 2Kp)
    b0 = params["q0_b"][None, :]
    b2 = params["q2_b"][None, :]
    bmulv = jnp.concatenate([jnp.pad(params["mu_b"], (0, Kp - K)),
                             jnp.pad(params["lv_b"], (0, Kp - K))])[None, :]

    # --- A1) per-topic logsumexp over vocab (online, tiled) ---
    lse = pl.pallas_call(
        functools.partial(_beta_stats_kernel, vocab_size=V, vocab_tile=tv),
        out_shape=jax.ShapeDtypeStruct((Kp, 1), jnp.float32),
        grid=(nv,),
        in_specs=[pl.BlockSpec((Kp, E), lambda j: (0, 0)),
                  pl.BlockSpec((E, tv), lambda j: (0, j))],
        out_specs=pl.BlockSpec((Kp, 1), lambda j: (0, 0)),
        scratch_shapes=[pltpu.VMEM((Kp, 1), jnp.float32),
                        pltpu.VMEM((Kp, 1), jnp.float32)],
        compiler_params=pltpu.CompilerParams(
            dimension_semantics=("arbitrary",)),
    )(alpha_p, rho_t)

    # --- A2) beta tiles, written as bf16 ---
    beta_t = pl.pallas_call(
        functools.partial(_beta_kernel, vocab_size=V, vocab_tile=tv),
        out_shape=jax.ShapeDtypeStruct((Kp, Vp), jnp.bfloat16),
        grid=(nv,),
        in_specs=[pl.BlockSpec((Kp, E), lambda j: (0, 0)),
                  pl.BlockSpec((E, tv), lambda j: (0, j)),
                  pl.BlockSpec((Kp, 1), lambda j: (0, 0))],
        out_specs=pl.BlockSpec((Kp, tv), lambda j: (0, j)),
        compiler_params=pltpu.CompilerParams(
            dimension_semantics=("parallel",)),
    )(alpha_p, rho_t, lse)

    # --- B) encoder ---
    theta, kl_rows = pl.pallas_call(
        functools.partial(_encoder_kernel, num_topics=K, kp=Kp),
        out_shape=(jax.ShapeDtypeStruct((Bp, Kp), jnp.bfloat16),
                   jax.ShapeDtypeStruct((Bp, 1), jnp.float32)),
        grid=(nb, nv),
        in_specs=[
            pl.BlockSpec((tb, tv), lambda i, j: (i, j)),   # bows (streamed)
            pl.BlockSpec((tv, H), lambda i, j: (j, 0)),    # w0^T (streamed)
            _const2((1, H)),                               # b0    (resident)
            _const2((H, H)),                               # w2^T
            _const2((1, H)),                               # b2
            _const2((H, 2 * Kp)),                          # fused mu|lv weight
            _const2((1, 2 * Kp)),                          # fused mu|lv bias
        ],
        out_specs=(
            pl.BlockSpec((tb, Kp), lambda i, j: (i, 0)),   # theta (bf16)
            pl.BlockSpec((tb, 1), lambda i, j: (i, 0)),    # per-row kl
        ),
        scratch_shapes=[pltpu.VMEM((tb, H), jnp.float32),  # acc of bows @ w0
                        pltpu.VMEM((tb, 1), jnp.float32)], # acc of row sums
        compiler_params=pltpu.CompilerParams(
            dimension_semantics=("parallel", "arbitrary")),
    )(bows_p, w0t, b0, w2t, b2, wmulv, bmulv)

    # --- C) decode + NLL ---
    dec_in_specs = [
        pl.BlockSpec((tb, Kp), lambda i, j: (i, 0)),       # theta (resident)
        pl.BlockSpec((Kp, tv), lambda i, j: (0, j)),       # beta  (streamed)
        pl.BlockSpec((tb, tv), lambda i, j: (i, j)),       # bows  (streamed)
    ]
    nll_spec = pl.BlockSpec((tb, 1), lambda i, j: (i, 0))
    dec_scratch = [pltpu.VMEM((tb, 1), jnp.float32)]
    cparams = pltpu.CompilerParams(
        dimension_semantics=("parallel", "arbitrary"))

    if return_res:
        res_p, nll_rows = pl.pallas_call(
            functools.partial(_decode_kernel, bf16_log=bf16_log),
            out_shape=(jax.ShapeDtypeStruct((Bp, Vp), jnp.float32),
                       jax.ShapeDtypeStruct((Bp, 1), jnp.float32)),
            grid=(nb, nv),
            in_specs=dec_in_specs,
            out_specs=(pl.BlockSpec((tb, tv), lambda i, j: (i, j)), nll_spec),
            scratch_shapes=dec_scratch,
            compiler_params=cparams,
        )(theta, beta_t, bows_p)
        res = res_p[:B, :V]
    else:
        (nll_rows,) = pl.pallas_call(
            functools.partial(_decode_kernel_no_res, bf16_log=bf16_log),
            out_shape=(jax.ShapeDtypeStruct((Bp, 1), jnp.float32),),
            grid=(nb, nv),
            in_specs=dec_in_specs,
            out_specs=(nll_spec,),
            scratch_shapes=dec_scratch,
            compiler_params=cparams,
        )(theta, beta_t, bows_p)
        res = None

    nll = jnp.mean(nll_rows[:B, 0])
    kl = jnp.mean(kl_rows[:B, 0])
    return nll + kl, nll, kl, res


# ---------------------------------------------------------------------------
# Pure-JAX reference (mirrors the PyTorch forward, eval mode, f32)
# ---------------------------------------------------------------------------
def etm_reference(bows, params):
    row_sum = jnp.sum(bows, axis=1, keepdims=True)
    nb = bows / jnp.where(row_sum > 0.0, row_sum, 1.0)
    h1 = jnp.tanh(nb @ params["q0_w"].T + params["q0_b"])
    h2 = jnp.tanh(h1 @ params["q2_w"].T + params["q2_b"])
    mu = h2 @ params["mu_w"].T + params["mu_b"]
    lv = h2 @ params["lv_w"].T + params["lv_b"]
    theta = jax.nn.softmax(mu, axis=-1)                           # swapped unpack
    logit = params["rho_w"] @ params["alpha_w"].T                 # (V, K)
    beta = jax.nn.softmax(logit, axis=0)
    res = theta @ beta.T + 1e-10
    predictions = jnp.log(res)
    nll = jnp.mean(-jnp.sum(predictions * bows, axis=1))
    kl = jnp.mean(-0.5 * jnp.sum(1.0 + mu - lv * lv - jnp.exp(mu), axis=-1))
    return nll + kl, nll, kl, res


def init_params(key, vocab_size, embed_size, num_topics, num_hiddens):
    ks = jax.random.split(key, 8)
    s = 0.05
    return {
        "rho_w":   s * jax.random.normal(ks[0], (vocab_size, embed_size), jnp.float32),
        "alpha_w": s * jax.random.normal(ks[1], (num_topics, embed_size), jnp.float32),
        "q0_w":    s * jax.random.normal(ks[2], (num_hiddens, vocab_size), jnp.float32),
        "q0_b":    s * jax.random.normal(ks[3], (num_hiddens,), jnp.float32),
        "q2_w":    s * jax.random.normal(ks[4], (num_hiddens, num_hiddens), jnp.float32),
        "q2_b":    s * jax.random.normal(ks[5], (num_hiddens,), jnp.float32),
        "mu_w":    s * jax.random.normal(ks[6], (num_topics, num_hiddens), jnp.float32),
        "mu_b":    jnp.zeros((num_topics,), jnp.float32),
        "lv_w":    s * jax.random.normal(ks[7], (num_topics, num_hiddens), jnp.float32),
        "lv_b":    jnp.zeros((num_topics,), jnp.float32),
    }


if __name__ == "__main__":
    # B / V deliberately not tile-aligned to exercise batch / vocab padding.
    B, V, H, K, E = 10, 300, 64, 16, 32
    key = jax.random.PRNGKey(0)
    k_bows, k_params = jax.random.split(key)

    bows = jnp.floor(jax.random.uniform(k_bows, (B, V), jnp.float32) * 5.0)
    params = init_params(k_params, V, E, K, H)

    # vocab_tile=128 -> nv=3: exercises the tiled online beta softmax and the
    # vocab-reduction accumulators.
    neg_elbo, nll, kl, res = etm_forward(bows, params, vocab_tile=128)
    jax.block_until_ready(res)

    r_neg_elbo, r_nll, r_kl, r_res = etm_reference(bows, params)

    # bf16 weights / theta / beta / bows + approx reciprocals -> moderate tol
    assert res.shape == (B, V)
    assert jnp.allclose(res, r_res, rtol=1e-2, atol=5e-5), "res mismatch"
    assert jnp.allclose(nll, r_nll, rtol=1e-2, atol=1e-2), "nll mismatch"
    assert jnp.allclose(kl, r_kl, rtol=1e-2, atol=1e-3), "kl mismatch"
    assert jnp.allclose(neg_elbo, r_neg_elbo, rtol=1e-2, atol=1e-2), "elbo mismatch"

    # loss-only path with default tiles (nv=1): skips the (B, V) res HBM write
    ne2, nll2, kl2, res2 = etm_forward(bows, params, return_res=False)
    jax.block_until_ready(nll2)
    assert res2 is None
    assert jnp.allclose(nll2, r_nll, rtol=1e-2, atol=1e-2), "nll (no-res) mismatch"
    assert jnp.allclose(kl2, r_kl, rtol=1e-2, atol=1e-3), "kl (no-res) mismatch"

    print("KERNEL_OK")
</pallas_src>

<mosaic_0001>
module attributes {stable_mosaic.version = 11 : i64} {
  func.func @_beta_stats_kernel(%arg0: i32, %arg1: memref<128x32xbf16, #tpu.memory_space<vmem>>, %arg2: memref<32x128xbf16, #tpu.memory_space<vmem>>, %arg3: memref<128x1xf32, #tpu.memory_space<vmem>>, %arg4: memref<128x1xf32, #tpu.memory_space<vmem>>, %arg5: memref<128x1xf32, #tpu.memory_space<vmem>>) attributes {dimension_semantics = [#tpu.dimension_semantics<arbitrary>], iteration_bounds = array<i64: 3>, scalar_prefetch = 0 : i64, scratch_operands = 2 : i64, tpu.core_type = #tpu.core_type<tc>, window_params = [{pipeline_mode = #tpu.pipeline_mode<synchronous>, transform_indices = @transform_0, window_bounds = array<i64: 128, 32>}, {transform_indices = @transform_1, window_bounds = array<i64: 32, 128>}, {pipeline_mode = #tpu.pipeline_mode<synchronous>, transform_indices = @transform_2, window_bounds = array<i64: 128, 1>}]} {
    %c0_i32 = arith.constant 0 : i32
    %0 = arith.cmpi eq, %arg0, %c0_i32 : i32
    %1 = arith.extui %0 : i1 to i32
    %c0_i32_0 = arith.constant 0 : i32
    %2 = arith.cmpi ne, %1, %c0_i32_0 : i32
    scf.if %2 {
      %cst_18 = arith.constant -1.000000e+30 : f32
      %34 = vector.broadcast %cst_18 : f32 to vector<128x1xf32>
      %c0_19 = arith.constant 0 : index
      %c0_20 = arith.constant 0 : index
      %35 = vector.load %arg4[%c0_19, %c0_20] : memref<128x1xf32, #tpu.memory_space<vmem>>, vector<128x1xf32>
      tpu.vector_store %arg4[%c0_19, %c0_20], %34 {strides = array<i32>} : memref<128x1xf32, #tpu.memory_space<vmem>>, vector<128x1xf32>,
      %cst_21 = arith.constant 0.000000e+00 : f32
      %36 = vector.broadcast %cst_21 : f32 to vector<128x1xf32>
      %c0_22 = arith.constant 0 : index
      %c0_23 = arith.constant 0 : index
      %37 = vector.load %arg5[%c0_22, %c0_23] : memref<128x1xf32, #tpu.memory_space<vmem>>, vector<128x1xf32>
      tpu.vector_store %arg5[%c0_22, %c0_23], %36 {strides = array<i32>} : memref<128x1xf32, #tpu.memory_space<vmem>>, vector<128x1xf32>,
    } else {
    }
    %c0 = arith.constant 0 : index
    %c0_1 = arith.constant 0 : index
    %3 = vector.load %arg1[%c0, %c0_1] : memref<128x32xbf16, #tpu.memory_space<vmem>>, vector<128x32xbf16>
    %c0_2 = arith.constant 0 : index
    %c0_3 = arith.constant 0 : index
    %4 = vector.load %arg2[%c0_2, %c0_3] : memref<32x128xbf16, #tpu.memory_space<vmem>>, vector<32x128xbf16>
    %cst = arith.constant dense<0.000000e+00> : vector<128x128xf32>
    %5 = tpu.matmul %3, %4, %cst {dimension_numbers = #tpu.dot_dimension_numbers<[1], [0], [0], [1], [0, 0, 1, 1], [], []>} : vector<128x32xbf16>, vector<32x128xbf16>, vector<128x128xf32> -> vector<128x128xf32>
    %c128_i32 = arith.constant 128 : i32
    %6 = arith.muli %arg0, %c128_i32 : i32
    %7 = tpu.iota {dimensions = array<i32: 1>} : vector<128x128xi32>
    %8 = vector.broadcast %6 : i32 to vector<128x128xi32>
    %9 = arith.addi %8, %7 : vector<128x128xi32>
    %c300_i32 = arith.constant 300 : i32
    %10 = vector.broadcast %c300_i32 : i32 to vector<128x128xi32>
    %11 = arith.cmpi slt, %9, %10 : vector<128x128xi32>
    %cst_4 = arith.constant -1.000000e+30 : f32
    %12 = vector.broadcast %cst_4 : f32 to vector<128x128xf32>
    %13 = arith.select %11, %5, %12 : vector<128x128xi1>, vector<128x128xf32>
    %c0_5 = arith.constant 0 : index
    %c0_6 = arith.constant 0 : index
    %14 = vector.load %arg4[%c0_5, %c0_6] : memref<128x1xf32, #tpu.memory_space<vmem>>, vector<128x1xf32>
    %cst_7 = arith.constant dense<0xFF800000> : vector<128xf32>
    %15 = vector.multi_reduction <maximumf>, %13, %cst_7 [1] : vector<128x128xf32> to vector<128xf32>
    %16 = vector.shape_cast %15 : vector<128xf32> to vector<128x1xf32>
    %17 = arith.maximumf %14, %16 : vector<128x1xf32>
    %c0_8 = arith.constant 0 : index
    %c0_9 = arith.constant 0 : index
    %18 = vector.load %arg5[%c0_8, %c0_9] : memref<128x1xf32, #tpu.memory_space<vmem>>, vector<128x1xf32>
    %c0_10 = arith.constant 0 : index
    %c0_11 = arith.constant 0 : index
    %19 = vector.load %arg4[%c0_10, %c0_11] : memref<128x1xf32, #tpu.memory_space<vmem>>, vector<128x1xf32>
    %20 = arith.subf %19, %17 : vector<128x1xf32>
    %21 = math.exp %20 : vector<128x1xf32>
    %22 = arith.mulf %18, %21 : vector<128x1xf32>
    %23 = vector.broadcast %17 : vector<128x1xf32> to vector<128x128xf32>
    %24 = arith.subf %13, %23 : vector<128x128xf32>
    %25 = math.exp %24 : vector<128x128xf32>
    %cst_12 = arith.constant dense<0.000000e+00> : vector<128xf32>
    %26 = vector.multi_reduction <add>, %25, %cst_12 [1] : vector<128x128xf32> to vector<128xf32>
    %27 = vector.shape_cast %26 : vector<128xf32> to vector<128x1xf32>
    %28 = arith.addf %22, %27 : vector<128x1xf32>
    %c0_13 = arith.constant 0 : index
    %c0_14 = arith.constant 0 : index
    %29 = vector.load %arg5[%c0_13, %c0_14] : memref<128x1xf32, #tpu.memory_space<vmem>>, vector<128x1xf32>
    tpu.vector_store %arg5[%c0_13, %c0_14], %28 {strides = array<i32>} : memref<128x1xf32, #tpu.memory_space<vmem>>, vector<128x1xf32>,
    %c0_15 = arith.constant 0 : index
    %c0_16 = arith.constant 0 : index
    %30 = vector.load %arg4[%c0_15, %c0_16] : memref<128x1xf32, #tpu.memory_space<vmem>>, vector<128x1xf32>
    tpu.vector_store %arg4[%c0_15, %c0_16], %17 {strides = array<i32>} : memref<128x1xf32, #tpu.memory_space<vmem>>, vector<128x1xf32>,
    %c2_i32 = arith.constant 2 : i32
    %31 = arith.cmpi eq, %arg0, %c2_i32 : i32
    %32 = arith.extui %31 : i1 to i32
    %c0_i32_17 = arith.constant 0 : i32
    %33 = arith.cmpi ne, %32, %c0_i32_17 : i32
    scf.if %33 {
      %c0_18 = arith.constant 0 : index
      %c0_19 = arith.constant 0 : index
      %34 = vector.load %arg4[%c0_18, %c0_19] : memref<128x1xf32, #tpu.memory_space<vmem>>, vector<128x1xf32>
      %c0_20 = arith.constant 0 : index
      %c0_21 = arith.constant 0 : index
      %35 = vector.load %arg5[%c0_20, %c0_21] : memref<128x1xf32, #tpu.memory_space<vmem>>, vector<128x1xf32>
      %36 = math.log %35 : vector<128x1xf32>
      %37 = arith.addf %34, %36 : vector<128x1xf32>
      %c0_22 = arith.constant 0 : index
      %c0_23 = arith.constant 0 : index
      %38 = vector.load %arg3[%c0_22, %c0_23] : memref<128x1xf32, #tpu.memory_space<vmem>>, vector<128x1xf32>
      tpu.vector_store %arg3[%c0_22, %c0_23], %37 {strides = array<i32>} : memref<128x1xf32, #tpu.memory_space<vmem>>, vector<128x1xf32>,
    } else {
    }
    return
  }
  func.func @transform_0(%arg0: i32) -> (i32, i32) {
    %c0_i32 = arith.constant 0 : i32
    %c0_i32_0 = arith.constant 0 : i32
    %c0_i32_1 = arith.constant 0 : i32
    return %c0_i32, %c0_i32_0 : i32, i32
  }
  func.func @transform_1(%arg0: i32) -> (i32, i32) {
    %c0_i32 = arith.constant 0 : i32
    %c0_i32_0 = arith.constant 0 : i32
    return %c0_i32, %arg0 : i32, i32
  }
  func.func @transform_2(%arg0: i32) -> (i32, i32) {
    %c0_i32 = arith.constant 0 : i32
    %c0_i32_0 = arith.constant 0 : i32
    %c0_i32_1 = arith.constant 0 : i32
    return %c0_i32, %c0_i32_0 : i32, i32
  }
}

</mosaic_0001>

<llo_original>
// kernel: tpu_custom_call.1
$region0: #{tpu_custom_call.1}
  #allocation0 [shape = 'u32[]', space=smem, size = 0x4, offset = 0x4, fixed_abs, tag = 'smem constant byte address 0x4 - core index']
  #allocation1 [shape = 'u32[144,128]{1,0:T(1,128)}', space=vmem, size = 0x12000, scoped, tag = 'internal scratch']
  #allocation2 [shape = 'f32[128,1]{1,0:T(8,128)}', space=vmem, size = 0x10000, scoped, tag = 'scratch operand']
  #allocation3 [shape = 'f32[128,1]{1,0:T(8,128)}', space=vmem, size = 0x10000, scoped, tag = 'scratch operand']
  %s0 = inlined_call_operand.vmem [shape: bf16[128,32], index: 0, kind: input, shape index: {}]
  %s1 = inlined_call_operand.vmem [shape: bf16[32,384], index: 1, kind: input, shape index: {}]
  %s2 = inlined_call_operand.vmem [shape: f32[128,1], index: 2, kind: output, shape index: {}]
  %s3 = sld [smem:[#allocation0]]
  $region90: #{tpu_custom_call.1} parent=0
    _
  %s5 = ssub.s32 1, %s3
  %s6 = scalar_select 0, %s5, %s3
  $region1: #{tpu_custom_call.1} parent=0
    #allocation4 [shape = 'u8[16384]{0}', space=vmem, size = 0x4000, scoped, tag = 'input window, operand 1']
    loop: start=0, step=1, limit=5
    $region2: #{tpu_custom_call.1} parent=1 // loop_pre_header
      _
    $region3: #{tpu_custom_call.1} parent=1 // loop_header
      %s8 = sphi 0, %s12
      %p9 = scmp.ge.s32.totalorder %s8, 5
      %s16 = sphi 0, %s16
      %s18 = sphi 0, %s16
      %s19 = sphi 0, %s18
      %s33 = sphi 0, %s19
      %s39 = sphi 0, %s41
      %s42 = sphi 0, %s39
      %s43 = sphi 0, %s42
      %s59 = sphi 0, %s43
      %s63 = sphi 0, %s63
      %s65 = sphi 0, %s63
      %s66 = sphi 0, %s65
      %s80 = sphi 0, %s66
    $region4: #{tpu_custom_call.1} parent=1 // loop_header_branch
      %11 = sbr.rel (%p9) target = $region8
    $region5: #{tpu_custom_call.1} parent=1 // loop_body
      %s13 = ssub.s32 %s8, 1
      %s14 = ssub.s32 %s8, 2
      %s15 = sadd.s32 %s8, 1
      %s17 = sadd.s32 %s16, 1
      %p20 = scmp.eq.s32.totalorder %s8, 2
      %p21 = scmp.ne.s32.totalorder %s16, %s18
      %p22 = scmp.eq.s32.totalorder %s8, 0
      %p23 = por %p21, %p22
      %p24 = scmp.ne.s32.totalorder %s16, %s18
      %p25 = scmp.eq.s32.totalorder %s13, 2
      %p26 = por %p24, %p25
      %p27 = scmp.ne.s32.totalorder %s18, %s19
      %p28 = scmp.eq.s32.totalorder %s13, 0
      %p29 = por %p27, %p28
      %p30 = scmp.ne.s32.totalorder %s18, %s19
      %p31 = scmp.eq.s32.totalorder %s14, 2
      %p32 = por %p30, %p31
      %p34 = scmp.ne.s32.totalorder %s19, %s33
      %p35 = scmp.eq.s32.totalorder %s14, 0
      %p36 = por %p34, %p35
      %s37 = ssub.s32 %s8, %s15
      %p38 = scmp.eq.s32.totalorder %s37, 0
      %s40 = sadd.s32 %s39, 1
      %s41 = scalar_select %p38, %s39, %s40
      %p44 = pneg %p38
      %p45 = scmp.eq.s32.totalorder %s8, 2
      %p46 = por %p44, %p45
      %p47 = scmp.ne.s32.totalorder %s39, %s42
      %p48 = scmp.eq.s32.totalorder %s8, 0
      %p49 = por %p47, %p48
      %p50 = scmp.ne.s32.totalorder %s39, %s42
      %p51 = scmp.eq.s32.totalorder %s13, 2
      %p52 = por %p50, %p51
      %p53 = scmp.ne.s32.totalorder %s42, %s43
      %p54 = scmp.eq.s32.totalorder %s13, 0
      %p55 = por %p53, %p54
      %p56 = scmp.ne.s32.totalorder %s42, %s43
      %p57 = scmp.eq.s32.totalorder %s14, 2
      %p58 = por %p56, %p57
      %p60 = scmp.ne.s32.totalorder %s43, %s59
      %p61 = scmp.eq.s32.totalorder %s14, 0
      %p62 = por %p60, %p61
      %s64 = sadd.s32 %s63, 1
      %p67 = scmp.eq.s32.totalorder %s8, 2
      %p68 = scmp.ne.s32.totalorder %s63, %s65
      %p69 = scmp.eq.s32.totalorder %s8, 0
      %p70 = por %p68, %p69
      %p71 = scmp.ne.s32.totalorder %s63, %s65
      %p72 = scmp.eq.s32.totalorder %s13, 2
      %p73 = por %p71, %p72
      %p74 = scmp.ne.s32.totalorder %s65, %s66
      %p75 = scmp.eq.s32.totalorder %s13, 0
      %p76 = por %p74, %p75
      %p77 = scmp.ne.s32.totalorder %s65, %s66
      %p78 = scmp.eq.s32.totalorder %s14, 2
      %p79 = por %p77, %p78
      %p81 = scmp.ne.s32.totalorder %s66, %s80
      %p82 = scmp.eq.s32.totalorder %s14, 0
      %p83 = por %p81, %p82
      %p84 = scmp.le.s32.totalorder 1, %s8
      %p85 = scmp.lt.s32.totalorder %s8, 4
      %p86 = pnand %p84, %p85
      %p87 = pneg %p86
      // Predicated region
      $region9: #{tpu_custom_call.1} parent=5 // pred_check
        _
      $region10: #{tpu_custom_call.1} parent=5 // pred_check_branch
        %89 = sbr.rel (%p86) target = $region12
      $region11: #{tpu_custom_call.1} parent=5 // pred_region
        %s90 = ssub.s32 %s8, 1
        // Predicated region
        $region13: #{tpu_custom_call.1} parent=11 // pred_check
          %p91 = pneg %p29
        $region14: #{tpu_custom_call.1} parent=11 // pred_check_branch
          %93 = sbr.rel (%p91) target = $region16
        $region15: #{tpu_custom_call.1} parent=11 // pred_region
          _
        $region16: #{tpu_custom_call.1} parent=11 // pred_fallthru
          _
      $region12: #{tpu_custom_call.1} parent=5 // pred_fallthru
        _
      %p94 = scmp.lt.s32.totalorder %s8, 3
      // Predicated region
      $region17: #{tpu_custom_call.1} parent=5 // pred_check
        %p95 = pneg %p94
      $region18: #{tpu_custom_call.1} parent=5 // pred_check_branch
        %97 = sbr.rel (%p95) target = $region20
      $region19: #{tpu_custom_call.1} parent=5 // pred_region
        // Predicated region
        $region21: #{tpu_custom_call.1} parent=19 // pred_check
          %p98 = pneg %p49
        $region22: #{tpu_custom_call.1} parent=19 // pred_check_branch
          %100 = sbr.rel (%p98) target = $region24
        $region23: #{tpu_custom_call.1} parent=19 // pred_region
          %s101 = sand.u32 %s39, 1
          %s102 = sand.u32 %s39, 1
          %s103 = smul.addr %s102, 16
          %s104 = scalar_lea.vmem [#allocation4], %s103
          %s105 = smul.addr %s8, 4
          %s106 = scalar_lea.vmem %s1, %s105
          // Predicated region
          $region25: #{tpu_custom_call.1} parent=23 // pred_check
            _
          $region26: #{tpu_custom_call.1} parent=23 // pred_check_branch
            %108 = sbr.rel (0) target = $region28
          $region27: #{tpu_custom_call.1} parent=23 // pred_region
            // Predicated region
            $region29: #{tpu_custom_call.1} parent=27 // pred_check
              _
            $region30: #{tpu_custom_call.1} parent=27 // pred_check_branch
              %110 = sbr.rel target = $region32
            $region31: #{tpu_custom_call.1} parent=27 // pred_region
              // Predicated region
              $region44: #{tpu_custom_call.1} parent=31 // pred_check
                _
              $region45: #{tpu_custom_call.1} parent=31 // pred_check_branch
                %132 = sbr.rel (0) target = $region47
              $region46: #{tpu_custom_call.1} parent=31 // pred_region
                loop: start=0, step=1, limit=1
                $region48: #{tpu_custom_call.1} parent=46 // loop_pre_header
                  _
                $region49: #{tpu_custom_call.1} parent=46 // loop_header
                  %s134 = sphi 0, %s138
                  %p135 = scmp.ge.s32.totalorder %s134, 1
                  %s139 = sphi %s106, %s106
                  %s140 = sphi %s104, %s104
                $region50: #{tpu_custom_call.1} parent=46 // loop_header_branch
                  %137 = sbr.rel (%p135) target = $region54
                $region51: #{tpu_custom_call.1} parent=46 // loop_body
                  _
                $region52: #{tpu_custom_call.1} parent=46 // loop_footer
                  %s138 = sadd.s32 1, %s134
                $region53: #{tpu_custom_call.1} parent=46 // loop_footer_branch
                  %133 = sbr.rel target = $region49
                $region54: #{tpu_custom_call.1} parent=46 // loop_exit
                  _
                %s142 = ssub.s32 16, 1
                loop: start=0, step=1, limit=1
                $region55: #{tpu_custom_call.1} parent=46 // loop_pre_header
                  _
                $region56: #{tpu_custom_call.1} parent=46 // loop_header
                  %s144 = sphi 0, %s148
                  %p145 = scmp.ge.s32.totalorder %s144, 1
                  %s149 = sphi %s106, %s106
                  %s150 = sphi %s104, %s104
                $region57: #{tpu_custom_call.1} parent=46 // loop_header_branch
                  %147 = sbr.rel (%p145) target = $region61
                $region58: #{tpu_custom_call.1} parent=46 // loop_body
                  %v151 = vld [vmem:[%s149] sm:%s142]
                  %152 = vst [vmem:[%s150] sm:%s142] %v151
                  %v153 = vld [vmem:[%s149 + $0xc] sm:%s142]
                  %154 = vst [vmem:[%s150 + $0x4] sm:%s142] %v153
                  %v155 = vld [vmem:[%s149 + $0x18] sm:%s142]
                  %156 = vst [vmem:[%s150 + $0x8] sm:%s142] %v155
                  %v157 = vld [vmem:[%s149 + $0x24] sm:%s142]
                  %158 = vst [vmem:[%s150 + $0xc] sm:%s142] %v157
                $region59: #{tpu_custom_call.1} parent=46 // loop_footer
                  %s148 = sadd.s32 1, %s144
                $region60: #{tpu_custom_call.1} parent=46 // loop_footer_branch
                  %143 = sbr.rel target = $region56
                $region61: #{tpu_custom_call.1} parent=46 // loop_exit
                  _
              $region47: #{tpu_custom_call.1} parent=31 // pred_fallthru
                _
            $region32: #{tpu_custom_call.1} parent=27 // pred_fallthru
              _
            // Predicated region
            $region33: #{tpu_custom_call.1} parent=27 // pred_check
              _
            $region34: #{tpu_custom_call.1} parent=27 // pred_check_branch
              %112 = sbr.rel (0) target = $region36
            $region35: #{tpu_custom_call.1} parent=27 // pred_region
              %s114 = ssub.s32 16, 1
              loop: start=0, step=1, limit=1
              $region37: #{tpu_custom_call.1} parent=35 // loop_pre_header
                _
              $region38: #{tpu_custom_call.1} parent=35 // loop_header
                %s116 = sphi 0, %s120
                %p117 = scmp.ge.s32.totalorder %s116, 1
                %s121 = sphi %s106, %s106
                %s122 = sphi %s104, %s104
              $region39: #{tpu_custom_call.1} parent=35 // loop_header_branch
                %119 = sbr.rel (%p117) target = $region43
              $region40: #{tpu_custom_call.1} parent=35 // loop_body
                %v123 = vld [vmem:[%s121] sm:%s114]
                %124 = vst [vmem:[%s122] sm:%s114] %v123
                %v125 = vld [vmem:[%s121 + $0xc] sm:%s114]
                %126 = vst [vmem:[%s122 + $0x4] sm:%s114] %v125
                %v127 = vld [vmem:[%s121 + $0x18] sm:%s114]
                %128 = vst [vmem:[%s122 + $0x8] sm:%s114] %v127
                %v129 = vld [vmem:[%s121 + $0x24] sm:%s114]
                %130 = vst [vmem:[%s122 + $0xc] sm:%s114] %v129
              $region41: #{tpu_custom_call.1} parent=35 // loop_footer
                %s120 = sadd.s32 1, %s116
              $region42: #{tpu_custom_call.1} parent=35 // loop_footer_branch
                %115 = sbr.rel target = $region38
              $region43: #{tpu_custom_call.1} parent=35 // loop_exit
                _
            $region36: #{tpu_custom_call.1} parent=27 // pred_fallthru
              _
          $region28: #{tpu_custom_call.1} parent=23 // pred_fallthru
            _
          %159 = vnop
        $region24: #{tpu_custom_call.1} parent=19 // pred_fallthru
          _
      $region20: #{tpu_custom_call.1} parent=5 // pred_fallthru
        _
      %p160 = scmp.le.s32.totalorder 1, %s8
      %p161 = scmp.lt.s32.totalorder %s8, 4
      %p162 = pnand %p160, %p161
      %p163 = pneg %p162
      // Predicated region
      $region62: #{tpu_custom_call.1} parent=5 // pred_check
        _
      $region63: #{tpu_custom_call.1} parent=5 // pred_check_branch
        %165 = sbr.rel (%p162) target = $region65
      $region64: #{tpu_custom_call.1} parent=5 // pred_region
        %s166 = ssub.s32 %s8, 1
        %s167 = sand.u32 %s42, 1
        %s168 = sand.u32 %s42, 1
        %s169 = smul.addr %s168, 16
        %s170 = scalar_lea.vmem [#allocation4], %s169
        // Predicated region
        $region66: #{tpu_custom_call.1} parent=64 // pred_check
          %p171 = pneg %p55
        $region67: #{tpu_custom_call.1} parent=64 // pred_check_branch
          %173 = sbr.rel (%p171) target = $region69
        $region68: #{tpu_custom_call.1} parent=64 // pred_region
          _
        $region69: #{tpu_custom_call.1} parent=64 // pred_fallthru
          _
        %p174 = pneg %p29
        %p175 = pneg %p26
        %s176 = sand.u32 %s42, 1
        %s177 = sand.u32 %s42, 1
        %s178 = smul.addr %s177, 16
        %s179 = scalar_lea.vmem [#allocation4], %s178
        %p180 = pneg %p55
        %p181 = pneg %p52
        %p182 = pneg %p76
        %p183 = pneg %p73
        %p185 = scmp.eq.s32.totalorder %s13, 0
        // Predicated region
        $region70: #{tpu_custom_call.1} parent=64 // pred_check
          %p186 = pneg %p185
        $region71: #{tpu_custom_call.1} parent=64 // pred_check_branch
          %188 = sbr.rel (%p186) target = $region73
        $region72: #{tpu_custom_call.1} parent=64 // pred_region
          %vm189 = vcmask 7168
          %190 = vst.msk [vmem:[#allocation2] sm:$0xff] %vm189, -1e+30
          %191 = vst.msk [vmem:[#allocation2 + $0x8] sm:$0xff] %vm189, -1e+30
          %192 = vst.msk [vmem:[#allocation2 + $0x10] sm:$0xff] %vm189, -1e+30
          %193 = vst.msk [vmem:[#allocation2 + $0x18] sm:$0xff] %vm189, -1e+30
          %194 = vst.msk [vmem:[#allocation2 + $0x20] sm:$0xff] %vm189, -1e+30
          %195 = vst.msk [vmem:[#allocation2 + $0x28] sm:$0xff] %vm189, -1e+30
          %196 = vst.msk [vmem:[#allocation2 + $0x30] sm:$0xff] %vm189, -1e+30
          %197 = vst.msk [vmem:[#allocation2 + $0x38] sm:$0xff] %vm189, -1e+30
          %198 = vst.msk [vmem:[#allocation2 + $0x40] sm:$0xff] %vm189, -1e+30
          %199 = vst.msk [vmem:[#allocation2 + $0x48] sm:$0xff] %vm189, -1e+30
          %200 = vst.msk [vmem:[#allocation2 + $0x50] sm:$0xff] %vm189, -1e+30
          %201 = vst.msk [vmem:[#allocation2 + $0x58] sm:$0xff] %vm189, -1e+30
          %202 = vst.msk [vmem:[#allocation2 + $0x60] sm:$0xff] %vm189, -1e+30
          %203 = vst.msk [vmem:[#allocation2 + $0x68] sm:$0xff] %vm189, -1e+30
          %204 = vst.msk [vmem:[#allocation2 + $0x70] sm:$0xff] %vm189, -1e+30
          %205 = vst.msk [vmem:[#allocation2 + $0x78] sm:$0xff] %vm189, -1e+30
          %206 = vst.msk [vmem:[#allocation3] sm:$0xff] %vm189, 0.0
          %207 = vst.msk [vmem:[#allocation3 + $0x8] sm:$0xff] %vm189, 0.0
          %208 = vst.msk [vmem:[#allocation3 + $0x10] sm:$0xff] %vm189, 0.0
          %209 = vst.msk [vmem:[#allocation3 + $0x18] sm:$0xff] %vm189, 0.0
          %210 = vst.msk [vmem:[#allocation3 + $0x20] sm:$0xff] %vm189, 0.0
          %211 = vst.msk [vmem:[#allocation3 + $0x28] sm:$0xff] %vm189, 0.0
          %212 = vst.msk [vmem:[#allocation3 + $0x30] sm:$0xff] %vm189, 0.0
          %213 = vst.msk [vmem:[#allocation3 + $0x38] sm:$0xff] %vm189, 0.0
          %214 = vst.msk [vmem:[#allocation3 + $0x40] sm:$0xff] %vm189, 0.0
          %215 = vst.msk [vmem:[#allocation3 + $0x48] sm:$0xff] %vm189, 0.0
          %216 = vst.msk [vmem:[#allocation3 + $0x50] sm:$0xff] %vm189, 0.0
          %217 = vst.msk [vmem:[#allocation3 + $0x58] sm:$0xff] %vm189, 0.0
          %218 = vst.msk [vmem:[#allocation3 + $0x60] sm:$0xff] %vm189, 0.0
          %219 = vst.msk [vmem:[#allocation3 + $0x68] sm:$0xff] %vm189, 0.0
          %220 = vst.msk [vmem:[#allocation3 + $0x70] sm:$0xff] %vm189, 0.0
          %221 = vst.msk [vmem:[#allocation3 + $0x78] sm:$0xff] %vm189, 0.0
        $region73: #{tpu_custom_call.1} parent=64 // pred_fallthru
          _
        %v222 = vld [vmem:[%s0] sm:$0xf]
        %v223 = vld [vmem:[%s0 + $0x4] sm:$0xf]
        %v224 = vld [vmem:[%s0 + $0x8] sm:$0xf]
        %v225 = vld [vmem:[%s0 + $0xc] sm:$0xf]
        %v226 = vld [vmem:[%s0 + $0x10] sm:$0xf]
        %v227 = vld [vmem:[%s0 + $0x14] sm:$0xf]
        %v228 = vld [vmem:[%s0 + $0x18] sm:$0xf]
        %v229 = vld [vmem:[%s0 + $0x1c] sm:$0xf]
        %v230 = vld [vmem:[%s0 + $0x20] sm:$0xf]
        %v231 = vld [vmem:[%s0 + $0x24] sm:$0xf]
        %v232 = vld [vmem:[%s0 + $0x28] sm:$0xf]
        %v233 = vld [vmem:[%s0 + $0x2c] sm:$0xf]
        %v234 = vld [vmem:[%s0 + $0x30] sm:$0xf]
        %v235 = vld [vmem:[%s0 + $0x34] sm:$0xf]
        %v236 = vld [vmem:[%s0 + $0x38] sm:$0xf]
        %v237 = vld [vmem:[%s0 + $0x3c] sm:$0xf]
        %v238 = vld [vmem:[%s170] sm:$0xf]
        %v239 = vld [vmem:[%s170 + $0x4] sm:$0xf]
        %v240 = vld [vmem:[%s170 + $0x8] sm:$0xf]
        %v241 = vld [vmem:[%s170 + $0xc] sm:$0xf]
        %v258 = vunpack.c.l.b16 %v222
        %v259 = vunpack.c.l.b16 %v223
        %v260 = vunpack.c.l.b16 %v224
        %v261 = vunpack.c.l.b16 %v225
        %v262 = vunpack.c.l.b16 %v226
        %v263 = vunpack.c.l.b16 %v227
        %v264 = vunpack.c.l.b16 %v228
        %v265 = vunpack.c.l.b16 %v229
        %v266 = vunpack.c.l.b16 %v230
        %v267 = vunpack.c.l.b16 %v231
        %v268 = vunpack.c.l.b16 %v232
        %v269 = vunpack.c.l.b16 %v233
        %v270 = vunpack.c.l.b16 %v234
        %v271 = vunpack.c.l.b16 %v235
        %v272 = vunpack.c.l.b16 %v236
        %v273 = vunpack.c.l.b16 %v237
        %v274 = vpack.c.b16 %v259, %v258
        %v275 = vpack.c.b16 %v261, %v260
        %v276 = vpack.c.b16 %v263, %v262
        %v277 = vpack.c.b16 %v265, %v264
        %v278 = vpack.c.b16 %v267, %v266
        %v279 = vpack.c.b16 %v269, %v268
        %v280 = vpack.c.b16 %v271, %v270
        %v281 = vpack.c.b16 %v273, %v272
        %v286 = vunpack.c.l.b16 %v238
        %v287 = vunpack.c.l.b16 %v239
        %v288 = vunpack.c.l.b16 %v240
        %v289 = vunpack.c.l.b16 %v241
        %v290 = vpack.c.b16 %v287, %v286
        %v291 = vpack.c.b16 %v289, %v288
        %vm294 = vcmask 261120
        %v296 = vsel %vm294, %v274, 0
        %v299 = vsel %vm294, %v275, 0
        %v302 = vsel %vm294, %v276, 0
        %v305 = vsel %vm294, %v277, 0
        %v308 = vsel %vm294, %v278, 0
        %v311 = vsel %vm294, %v279, 0
        %v314 = vsel %vm294, %v280, 0
        %v317 = vsel %vm294, %v281, 0
        %319 = vmatprep.subr.bf16.mxu0 0
        %320 = vmatpush1.bf16.msra.mxu0 0
        %321 = vmatprep.subr.bf16.mxu0 0
        %322 = vmatpush1.bf16.msra.mxu0 0
        %323 = vmatprep.subr.bf16.mxu0 0
        %324 = vmatpush1.bf16.msra.mxu0 0
        %325 = vmatprep.subr.bf16.mxu0 0
        %326 = vmatpush1.bf16.msra.mxu0 0
        %327 = vmatprep.subr.bf16.mxu0 0
        %328 = vmatpush1.bf16.msra.mxu0 0
        %329 = vmatprep.subr.bf16.mxu0 0
        %330 = vmatpush1.bf16.msra.mxu0 0
        %331 = vmatprep.subr.bf16.mxu0 0
        %332 = vmatpush1.bf16.msra.mxu0 %v291
        %333 = vmatprep.subr.bf16.mxu0 0
        %334 = vmatpush1.bf16.msra.mxu0 %v290
        %335 = vmatprep.subr.bf16.mxu0 0
        %336 = vmatpush2.bf16.msra.mxu0 0
        %337 = vmatprep.subr.bf16.mxu0 0
        %338 = vmatpush2.bf16.msra.mxu0 0
        %339 = vmatprep.subr.bf16.mxu0 0
        %340 = vmatpush2.bf16.msra.mxu0 0
        %341 = vmatprep.subr.bf16.mxu0 0
        %342 = vmatpush2.bf16.msra.mxu0 0
        %343 = vmatprep.subr.bf16.mxu0 0
        %344 = vmatpush2.bf16.msra.mxu0 0
        %345 = vmatprep.subr.bf16.mxu0 0
        %346 = vmatpush2.bf16.msra.mxu0 0
        %347 = vmatprep.subr.bf16.mxu0 0
        %348 = vmatpush2.bf16.msra.mxu0 0
        %349 = vmatprep.subr.bf16.mxu0 0
        %350 = vmatpush2.bf16.msra.mxu0 0
        %351 = vmatprep.mubr.bf16.mxu0 0
        %352 = vmatmul.mubr.bf16.gmra.mxu0 %v296
        %v353 = vpop.f32.mrf.mxu0
        %v354 = vadd.f32 0.0, %v353
        %v355 = vpop.f32.mrf.mxu0
        %v356 = vpop.f32.mrf.mxu0
        %v357 = vadd.f32 0.0, %v356
        %v358 = vpop.f32.mrf.mxu0
        %359 = vmatprep.mubr.bf16.mxu0 0
        %360 = vmatmul.mubr.bf16.gmra.mxu0 %v299
        %v361 = vpop.f32.mrf.mxu0
        %v362 = vadd.f32 0.0, %v361
        %v363 = vpop.f32.mrf.mxu0
        %v364 = vpop.f32.mrf.mxu0
        %v365 = vadd.f32 0.0, %v364
        %v366 = vpop.f32.mrf.mxu0
        %367 = vmatprep.mubr.bf16.mxu0 0
        %368 = vmatmul.mubr.bf16.gmra.mxu0 %v302
        %v369 = vpop.f32.mrf.mxu0
        %v370 = vadd.f32 0.0, %v369
        %v371 = vpop.f32.mrf.mxu0
        %v372 = vpop.f32.mrf.mxu0
        %v373 = vadd.f32 0.0, %v372
        %v374 = vpop.f32.mrf.mxu0
        %375 = vmatprep.mubr.bf16.mxu0 0
        %376 = vmatmul.mubr.bf16.gmra.mxu0 %v305
        %v377 = vpop.f32.mrf.mxu0
        %v378 = vadd.f32 0.0, %v377
        %v379 = vpop.f32.mrf.mxu0
        %v380 = vpop.f32.mrf.mxu0
        %v381 = vadd.f32 0.0, %v380
        %v382 = vpop.f32.mrf.mxu0
        %383 = vmatprep.mubr.bf16.mxu0 0
        %384 = vmatmul.mubr.bf16.gmra.mxu0 %v308
        %v385 = vpop.f32.mrf.mxu0
        %v386 = vadd.f32 0.0, %v385
        %v387 = vpop.f32.mrf.mxu0
        %v388 = vpop.f32.mrf.mxu0
        %v389 = vadd.f32 0.0, %v388
        %v390 = vpop.f32.mrf.mxu0
        %391 = vmatprep.mubr.bf16.mxu0 0
        %392 = vmatmul.mubr.bf16.gmra.mxu0 %v311
        %v393 = vpop.f32.mrf.mxu0
        %v394 = vadd.f32 0.0, %v393
        %v395 = vpop.f32.mrf.mxu0
        %v396 = vpop.f32.mrf.mxu0
        %v397 = vadd.f32 0.0, %v396
        %v398 = vpop.f32.mrf.mxu0
        %399 = vmatprep.mubr.bf16.mxu0 0
        %400 = vmatmul.mubr.bf16.gmra.mxu0 %v314
        %v401 = vpop.f32.mrf.mxu0
        %v402 = vadd.f32 0.0, %v401
        %v403 = vpop.f32.mrf.mxu0
        %v404 = vpop.f32.mrf.mxu0
        %v405 = vadd.f32 0.0, %v404
        %v406 = vpop.f32.mrf.mxu0
        %407 = vmatprep.mubr.bf16.mxu0 0
        %408 = vmatmul.mubr.bf16.gmra.mxu0 %v317
        %v409 = vpop.f32.mrf.mxu0
        %v410 = vadd.f32 0.0, %v409
        %v411 = vpop.f32.mrf.mxu0
        %v412 = vpop.f32.mrf.mxu0
        %v413 = vadd.f32 0.0, %v412
        %v414 = vpop.f32.mrf.mxu0
        %415 = vdwg.mxu0
        %s416 = smul.u32 %s13, 128
        %v417 = vlaneseq
        %v418 = vand.u32 %v417, 127
        %v419 = vstv %s416
        %v420 = vadd.s32 %v419, %v418
        %vm421 = vcmp.lt.s32.totalorder %v420, 300
        %v422 = vsel %vm421, %v354, -1e+30
        %v423 = vsel %vm421, %v357, -1e+30
        %v424 = vsel %vm421, %v362, -1e+30
        %v425 = vsel %vm421, %v365, -1e+30
        %v426 = vsel %vm421, %v370, -1e+30
        %v427 = vsel %vm421, %v373, -1e+30
        %v428 = vsel %vm421, %v378, -1e+30
        %v429 = vsel %vm421, %v381, -1e+30
        %v430 = vsel %vm421, %v386, -1e+30
        %v431 = vsel %vm421, %v389, -1e+30
        %v432 = vsel %vm421, %v394, -1e+30
        %v433 = vsel %vm421, %v397, -1e+30
        %v434 = vsel %vm421, %v402, -1e+30
        %v435 = vsel %vm421, %v405, -1e+30
        %v436 = vsel %vm421, %v410, -1e+30
        %v437 = vsel %vm421, %v413, -1e+30
        %v438 = vld [vmem:[#allocation2] sm:$0xff]
        %v439 = vld [vmem:[#allocation2 + $0x8] sm:$0xff]
        %v440 = vld [vmem:[#allocation2 + $0x10] sm:$0xff]
        %v441 = vld [vmem:[#allocation2 + $0x18] sm:$0xff]
        %v442 = vld [vmem:[#allocation2 + $0x20] sm:$0xff]
        %v443 = vld [vmem:[#allocation2 + $0x28] sm:$0xff]
        %v444 = vld [vmem:[#allocation2 + $0x30] sm:$0xff]
        %v445 = vld [vmem:[#allocation2 + $0x38] sm:$0xff]
        %v446 = vld [vmem:[#allocation2 + $0x40] sm:$0xff]
        %v447 = vld [vmem:[#allocation2 + $0x48] sm:$0xff]
        %v448 = vld [vmem:[#allocation2 + $0x50] sm:$0xff]
        %v449 = vld [vmem:[#allocation2 + $0x58] sm:$0xff]
        %v450 = vld [vmem:[#allocation2 + $0x60] sm:$0xff]
        %v451 = vld [vmem:[#allocation2 + $0x68] sm:$0xff]
        %v452 = vld [vmem:[#allocation2 + $0x70] sm:$0xff]
        %v453 = vld [vmem:[#allocation2 + $0x78] sm:$0xff]
        %454 = vmax.xlane.f32.xlu0 %v422
        %v455 = vpop.xlane.xlu0 %454
        %456 = vmax.xlane.f32.xlu0 %v423
        %v457 = vpop.xlane.xlu0 %456
        %458 = vmax.xlane.f32.xlu0 %v424
        %v459 = vpop.xlane.xlu0 %458
        %460 = vmax.xlane.f32.xlu0 %v425
        %v461 = vpop.xlane.xlu0 %460
        %462 = vmax.xlane.f32.xlu0 %v426
        %v463 = vpop.xlane.xlu0 %462
        %464 = vmax.xlane.f32.xlu0 %v427
        %v465 = vpop.xlane.xlu0 %464
        %466 = vmax.xlane.f32.xlu0 %v428
        %v467 = vpop.xlane.xlu0 %466
        %468 = vmax.xlane.f32.xlu0 %v429
        %v469 = vpop.xlane.xlu0 %468
        %470 = vmax.xlane.f32.xlu0 %v430
        %v471 = vpop.xlane.xlu0 %470
        %472 = vmax.xlane.f32.xlu0 %v431
        %v473 = vpop.xlane.xlu0 %472
        %474 = vmax.xlane.f32.xlu0 %v432
        %v475 = vpop.xlane.xlu0 %474
        %476 = vmax.xlane.f32.xlu0 %v433
        %v477 = vpop.xlane.xlu0 %476
        %478 = vmax.xlane.f32.xlu0 %v434
        %v479 = vpop.xlane.xlu0 %478
        %480 = vmax.xlane.f32.xlu0 %v435
        %v481 = vpop.xlane.xlu0 %480
        %482 = vmax.xlane.f32.xlu0 %v436
        %v483 = vpop.xlane.xlu0 %482
        %484 = vmax.xlane.f32.xlu0 %v437
        %v485 = vpop.xlane.xlu0 %484
        %v486 = vmax.f32 %v438, %v455
        %v487 = vmax.f32 %v439, %v457
        %v488 = vmax.f32 %v440, %v459
        %v489 = vmax.f32 %v441, %v461
        %v490 = vmax.f32 %v442, %v463
        %v491 = vmax.f32 %v443, %v465
        %v492 = vmax.f32 %v444, %v467
        %v493 = vmax.f32 %v445, %v469
        %v494 = vmax.f32 %v446, %v471
        %v495 = vmax.f32 %v447, %v473
        %v496 = vmax.f32 %v448, %v475
        %v497 = vmax.f32 %v449, %v477
        %v498 = vmax.f32 %v450, %v479
        %v499 = vmax.f32 %v451, %v481
        %v500 = vmax.f32 %v452, %v483
        %v501 = vmax.f32 %v453, %v485
        %v502 = vld [vmem:[#allocation3] sm:$0xff]
        %v503 = vld [vmem:[#allocation3 + $0x8] sm:$0xff]
        %v504 = vld [vmem:[#allocation3 + $0x10] sm:$0xff]
        %v505 = vld [vmem:[#allocation3 + $0x18] sm:$0xff]
        %v506 = vld [vmem:[#allocation3 + $0x20] sm:$0xff]
        %v507 = vld [vmem:[#allocation3 + $0x28] sm:$0xff]
        %v508 = vld [vmem:[#allocation3 + $0x30] sm:$0xff]
        %v509 = vld [vmem:[#allocation3 + $0x38] sm:$0xff]
        %v510 = vld [vmem:[#allocation3 + $0x40] sm:$0xff]
        %v511 = vld [vmem:[#allocation3 + $0x48] sm:$0xff]
        %v512 = vld [vmem:[#allocation3 + $0x50] sm:$0xff]
        %v513 = vld [vmem:[#allocation3 + $0x58] sm:$0xff]
        %v514 = vld [vmem:[#allocation3 + $0x60] sm:$0xff]
        %v515 = vld [vmem:[#allocation3 + $0x68] sm:$0xff]
        %v516 = vld [vmem:[#allocation3 + $0x70] sm:$0xff]
        %v517 = vld [vmem:[#allocation3 + $0x78] sm:$0xff]
        %v518 = vsub.f32 %v438, %v486
        %v519 = vsub.f32 %v439, %v487
        %v520 = vsub.f32 %v440, %v488
        %v521 = vsub.f32 %v441, %v489
        %v522 = vsub.f32 %v442, %v490
        %v523 = vsub.f32 %v443, %v491
        %v524 = vsub.f32 %v444, %v492
        %v525 = vsub.f32 %v445, %v493
        %v526 = vsub.f32 %v446, %v494
        %v527 = vsub.f32 %v447, %v495
        %v528 = vsub.f32 %v448, %v496
        %v529 = vsub.f32 %v449, %v497
        %v530 = vsub.f32 %v450, %v498
        %v531 = vsub.f32 %v451, %v499
        %v532 = vsub.f32 %v452, %v500
        %v533 = vsub.f32 %v453, %v501
        %v534 = vmul.f32 %v518, 1.442695
        %v535 = vpow.pop %v534
        %v536 = vmul.f32 %v519, 1.442695
        %v537 = vpow.pop %v536
        %v538 = vmul.f32 %v520, 1.442695
        %v539 = vpow.pop %v538
        %v540 = vmul.f32 %v521, 1.442695
        %v541 = vpow.pop %v540
        %v542 = vmul.f32 %v522, 1.442695
        %v543 = vpow.pop %v542
        %v544 = vmul.f32 %v523, 1.442695
        %v545 = vpow.pop %v544
        %v546 = vmul.f32 %v524, 1.442695
        %v547 = vpow.pop %v546
        %v548 = vmul.f32 %v525, 1.442695
        %v549 = vpow.pop %v548
        %v550 = vmul.f32 %v526, 1.442695
        %v551 = vpow.pop %v550
        %v552 = vmul.f32 %v527, 1.442695
        %v553 = vpow.pop %v552
        %v554 = vmul.f32 %v528, 1.442695
        %v555 = vpow.pop %v554
        %v556 = vmul.f32 %v529, 1.442695
        %v557 = vpow.pop %v556
        %v558 = vmul.f32 %v530, 1.442695
        %v559 = vpow.pop %v558
        %v560 = vmul.f32 %v531, 1.442695
        %v561 = vpow.pop %v560
        %v562 = vmul.f32 %v532, 1.442695
        %v563 = vpow.pop %v562
        %v564 = vmul.f32 %v533, 1.442695
        %v565 = vpow.pop %v564
        %v566 = vmul.f32 %v502, %v535
        %v567 = vmul.f32 %v503, %v537
        %v568 = vmul.f32 %v504, %v539
        %v569 = vmul.f32 %v505, %v541
        %v570 = vmul.f32 %v506, %v543
        %v571 = vmul.f32 %v507, %v545
        %v572 = vmul.f32 %v508, %v547
        %v573 = vmul.f32 %v509, %v549
        %v574 = vmul.f32 %v510, %v551
        %v575 = vmul.f32 %v511, %v553
        %v576 = vmul.f32 %v512, %v555
        %v577 = vmul.f32 %v513, %v557
        %v578 = vmul.f32 %v514, %v559
        %v579 = vmul.f32 %v515, %v561
        %v580 = vmul.f32 %v516, %v563
        %v581 = vmul.f32 %v517, %v565
        %583 = vset.pattern.permute.xlu0 0
        %584 = vperm.xlu0 %583, %v486
        %v585 = vpop.permute.xlu0 %584
        %588 = vset.pattern.permute.xlu0 0
        %589 = vperm.xlu0 %588, %v487
        %v590 = vpop.permute.xlu0 %589
        %593 = vset.pattern.permute.xlu0 0
        %594 = vperm.xlu0 %593, %v488
        %v595 = vpop.permute.xlu0 %594
        %598 = vset.pattern.permute.xlu0 0
        %599 = vperm.xlu0 %598, %v489
        %v600 = vpop.permute.xlu0 %599
        %603 = vset.pattern.permute.xlu0 0
        %604 = vperm.xlu0 %603, %v490
        %v605 = vpop.permute.xlu0 %604
        %608 = vset.pattern.permute.xlu0 0
        %609 = vperm.xlu0 %608, %v491
        %v610 = vpop.permute.xlu0 %609
        %613 = vset.pattern.permute.xlu0 0
        %614 = vperm.xlu0 %613, %v492
        %v615 = vpop.permute.xlu0 %614
        %618 = vset.pattern.permute.xlu0 0
        %619 = vperm.xlu0 %618, %v493
        %v620 = vpop.permute.xlu0 %619
        %623 = vset.pattern.permute.xlu0 0
        %624 = vperm.xlu0 %623, %v494
        %v625 = vpop.permute.xlu0 %624
        %628 = vset.pattern.permute.xlu0 0
        %629 = vperm.xlu0 %628, %v495
        %v630 = vpop.permute.xlu0 %629
        %633 = vset.pattern.permute.xlu0 0
        %634 = vperm.xlu0 %633, %v496
        %v635 = vpop.permute.xlu0 %634
        %638 = vset.pattern.permute.xlu0 0
        %639 = vperm.xlu0 %638, %v497
        %v640 = vpop.permute.xlu0 %639
        %643 = vset.pattern.permute.xlu0 0
        %644 = vperm.xlu0 %643, %v498
        %v645 = vpop.permute.xlu0 %644
        %648 = vset.pattern.permute.xlu0 0
        %649 = vperm.xlu0 %648, %v499
        %v650 = vpop.permute.xlu0 %649
        %653 = vset.pattern.permute.xlu0 0
        %654 = vperm.xlu0 %653, %v500
        %v655 = vpop.permute.xlu0 %654
        %658 = vset.pattern.permute.xlu0 0
        %659 = vperm.xlu0 %658, %v501
        %v660 = vpop.permute.xlu0 %659
        %v662 = vsub.f32 %v422, %v585
        %v663 = vsub.f32 %v423, %v590
        %v664 = vsub.f32 %v424, %v595
        %v665 = vsub.f32 %v425, %v600
        %v666 = vsub.f32 %v426, %v605
        %v667 = vsub.f32 %v427, %v610
        %v668 = vsub.f32 %v428, %v615
        %v669 = vsub.f32 %v429, %v620
        %v670 = vsub.f32 %v430, %v625
        %v671 = vsub.f32 %v431, %v630
        %v672 = vsub.f32 %v432, %v635
        %v673 = vsub.f32 %v433, %v640
        %v674 = vsub.f32 %v434, %v645
        %v675 = vsub.f32 %v435, %v650
        %v676 = vsub.f32 %v436, %v655
        %v677 = vsub.f32 %v437, %v660
        %v678 = vmul.f32 %v662, 1.442695
        %v679 = vpow.pop %v678
        %v680 = vmul.f32 %v663, 1.442695
        %v681 = vpow.pop %v680
        %v682 = vmul.f32 %v664, 1.442695
        %v683 = vpow.pop %v682
        %v684 = vmul.f32 %v665, 1.442695
        %v685 = vpow.pop %v684
        %v686 = vmul.f32 %v666, 1.442695
        %v687 = vpow.pop %v686
        %v688 = vmul.f32 %v667, 1.442695
        %v689 = vpow.pop %v688
        %v690 = vmul.f32 %v668, 1.442695
        %v691 = vpow.pop %v690
        %v692 = vmul.f32 %v669, 1.442695
        %v693 = vpow.pop %v692
        %v694 = vmul.f32 %v670, 1.442695
        %v695 = vpow.pop %v694
        %v696 = vmul.f32 %v671, 1.442695
        %v697 = vpow.pop %v696
        %v698 = vmul.f32 %v672, 1.442695
        %v699 = vpow.pop %v698
        %v700 = vmul.f32 %v673, 1.442695
        %v701 = vpow.pop %v700
        %v702 = vmul.f32 %v674, 1.442695
        %v703 = vpow.pop %v702
        %v704 = vmul.f32 %v675, 1.442695
        %v705 = vpow.pop %v704
        %v706 = vmul.f32 %v676, 1.442695
        %v707 = vpow.pop %v706
        %v708 = vmul.f32 %v677, 1.442695
        %v709 = vpow.pop %v708
        %710 = vadd.xlane.f32.xlu0 %v679
        %v711 = vpop.xlane.xlu0 %710
        %712 = vadd.xlane.f32.xlu0 %v681
        %v713 = vpop.xlane.xlu0 %712
        %714 = vadd.xlane.f32.xlu0 %v683
        %v715 = vpop.xlane.xlu0 %714
        %716 = vadd.xlane.f32.xlu0 %v685
        %v717 = vpop.xlane.xlu0 %716
        %718 = vadd.xlane.f32.xlu0 %v687
        %v719 = vpop.xlane.xlu0 %718
        %720 = vadd.xlane.f32.xlu0 %v689
        %v721 = vpop.xlane.xlu0 %720
        %722 = vadd.xlane.f32.xlu0 %v691
        %v723 = vpop.xlane.xlu0 %722
        %724 = vadd.xlane.f32.xlu0 %v693
        %v725 = vpop.xlane.xlu0 %724
        %726 = vadd.xlane.f32.xlu0 %v695
        %v727 = vpop.xlane.xlu0 %726
        %728 = vadd.xlane.f32.xlu0 %v697
        %v729 = vpop.xlane.xlu0 %728
        %730 = vadd.xlane.f32.xlu0 %v699
        %v731 = vpop.xlane.xlu0 %730
        %732 = vadd.xlane.f32.xlu0 %v701
        %v733 = vpop.xlane.xlu0 %732
        %734 = vadd.xlane.f32.xlu0 %v703
        %v735 = vpop.xlane.xlu0 %734
        %736 = vadd.xlane.f32.xlu0 %v705
        %v737 = vpop.xlane.xlu0 %736
        %738 = vadd.xlane.f32.xlu0 %v707
        %v739 = vpop.xlane.xlu0 %738
        %740 = vadd.xlane.f32.xlu0 %v709
        %v741 = vpop.xlane.xlu0 %740
        %v742 = vadd.f32 %v566, %v711
        %v743 = vadd.f32 %v567, %v713
        %v744 = vadd.f32 %v568, %v715
        %v745 = vadd.f32 %v569, %v717
        %v746 = vadd.f32 %v570, %v719
        %v747 = vadd.f32 %v571, %v721
        %v748 = vadd.f32 %v572, %v723
        %v749 = vadd.f32 %v573, %v725
        %v750 = vadd.f32 %v574, %v727
        %v751 = vadd.f32 %v575, %v729
        %v752 = vadd.f32 %v576, %v731
        %v753 = vadd.f32 %v577, %v733
        %v754 = vadd.f32 %v578, %v735
        %v755 = vadd.f32 %v579, %v737
        %v756 = vadd.f32 %v580, %v739
        %v757 = vadd.f32 %v581, %v741
        %vm758 = vcmask 7168
        %759 = vst.msk [vmem:[#allocation3] sm:$0xff] %vm758, %v742
        %760 = vst.msk [vmem:[#allocation3 + $0x8] sm:$0xff] %vm758, %v743
        %761 = vst.msk [vmem:[#allocation3 + $0x10] sm:$0xff] %vm758, %v744
        %762 = vst.msk [vmem:[#allocation3 + $0x18] sm:$0xff] %vm758, %v745
        %763 = vst.msk [vmem:[#allocation3 + $0x20] sm:$0xff] %vm758, %v746
        %764 = vst.msk [vmem:[#allocation3 + $0x28] sm:$0xff] %vm758, %v747
        %765 = vst.msk [vmem:[#allocation3 + $0x30] sm:$0xff] %vm758, %v748
        %766 = vst.msk [vmem:[#allocation3 + $0x38] sm:$0xff] %vm758, %v749
        %767 = vst.msk [vmem:[#allocation3 + $0x40] sm:$0xff] %vm758, %v750
        %768 = vst.msk [vmem:[#allocation3 + $0x48] sm:$0xff] %vm758, %v751
        %769 = vst.msk [vmem:[#allocation3 + $0x50] sm:$0xff] %vm758, %v752
        %770 = vst.msk [vmem:[#allocation3 + $0x58] sm:$0xff] %vm758, %v753
        %771 = vst.msk [vmem:[#allocation3 + $0x60] sm:$0xff] %vm758, %v754
        %772 = vst.msk [vmem:[#allocation3 + $0x68] sm:$0xff] %vm758, %v755
        %773 = vst.msk [vmem:[#allocation3 + $0x70] sm:$0xff] %vm758, %v756
        %774 = vst.msk [vmem:[#allocation3 + $0x78] sm:$0xff] %vm758, %v757
        %775 = vst.msk [vmem:[#allocation2] sm:$0xff] %vm758, %v486
        %776 = vst.msk [vmem:[#allocation2 + $0x8] sm:$0xff] %vm758, %v487
        %777 = vst.msk [vmem:[#allocation2 + $0x10] sm:$0xff] %vm758, %v488
        %778 = vst.msk [vmem:[#allocation2 + $0x18] sm:$0xff] %vm758, %v489
        %779 = vst.msk [vmem:[#allocation2 + $0x20] sm:$0xff] %vm758, %v490
        %780 = vst.msk [vmem:[#allocation2 + $0x28] sm:$0xff] %vm758, %v491
        %781 = vst.msk [vmem:[#allocation2 + $0x30] sm:$0xff] %vm758, %v492
        %782 = vst.msk [vmem:[#allocation2 + $0x38] sm:$0xff] %vm758, %v493
        %783 = vst.msk [vmem:[#allocation2 + $0x40] sm:$0xff] %vm758, %v494
        %784 = vst.msk [vmem:[#allocation2 + $0x48] sm:$0xff] %vm758, %v495
        %785 = vst.msk [vmem:[#allocation2 + $0x50] sm:$0xff] %vm758, %v496
        %786 = vst.msk [vmem:[#allocation2 + $0x58] sm:$0xff] %vm758, %v497
        %787 = vst.msk [vmem:[#allocation2 + $0x60] sm:$0xff] %vm758, %v498
        %788 = vst.msk [vmem:[#allocation2 + $0x68] sm:$0xff] %vm758, %v499
        %789 = vst.msk [vmem:[#allocation2 + $0x70] sm:$0xff] %vm758, %v500
        %790 = vst.msk [vmem:[#allocation2 + $0x78] sm:$0xff] %vm758, %v501
        %p791 = scmp.eq.s32.totalorder %s13, 2
        // Predicated region
        $region74: #{tpu_custom_call.1} parent=64 // pred_check
          %p792 = pneg %p791
        $region75: #{tpu_custom_call.1} parent=64 // pred_check_branch
          %794 = sbr.rel (%p792) target = $region77
        $region76: #{tpu_custom_call.1} parent=64 // pred_region
          %v795 = vld [vmem:[#allocation2] sm:$0xff]
          %v796 = vld [vmem:[#allocation2 + $0x8] sm:$0xff]
          %v797 = vld [vmem:[#allocation2 + $0x10] sm:$0xff]
          %v798 = vld [vmem:[#allocation2 + $0x18] sm:$0xff]
          %v799 = vld [vmem:[#allocation2 + $0x20] sm:$0xff]
          %v800 = vld [vmem:[#allocation2 + $0x28] sm:$0xff]
          %v801 = vld [vmem:[#allocation2 + $0x30] sm:$0xff]
          %v802 = vld [vmem:[#allocation2 + $0x38] sm:$0xff]
          %v803 = vld [vmem:[#allocation2 + $0x40] sm:$0xff]
          %v804 = vld [vmem:[#allocation2 + $0x48] sm:$0xff]
          %v805 = vld [vmem:[#allocation2 + $0x50] sm:$0xff]
          %v806 = vld [vmem:[#allocation2 + $0x58] sm:$0xff]
          %v807 = vld [vmem:[#allocation2 + $0x60] sm:$0xff]
          %v808 = vld [vmem:[#allocation2 + $0x68] sm:$0xff]
          %v809 = vld [vmem:[#allocation2 + $0x70] sm:$0xff]
          %v810 = vld [vmem:[#allocation2 + $0x78] sm:$0xff]
          %v811 = vld [vmem:[#allocation3] sm:$0xff]
          %v812 = vld [vmem:[#allocation3 + $0x8] sm:$0xff]
          %v813 = vld [vmem:[#allocation3 + $0x10] sm:$0xff]
          %v814 = vld [vmem:[#allocation3 + $0x18] sm:$0xff]
          %v815 = vld [vmem:[#allocation3 + $0x20] sm:$0xff]
          %v816 = vld [vmem:[#allocation3 + $0x28] sm:$0xff]
          %v817 = vld [vmem:[#allocation3 + $0x30] sm:$0xff]
          %v818 = vld [vmem:[#allocation3 + $0x38] sm:$0xff]
          %v819 = vld [vmem:[#allocation3 + $0x40] sm:$0xff]
          %v820 = vld [vmem:[#allocation3 + $0x48] sm:$0xff]
          %v821 = vld [vmem:[#allocation3 + $0x50] sm:$0xff]
          %v822 = vld [vmem:[#allocation3 + $0x58] sm:$0xff]
          %v823 = vld [vmem:[#allocation3 + $0x60] sm:$0xff]
          %v824 = vld [vmem:[#allocation3 + $0x68] sm:$0xff]
          %v825 = vld [vmem:[#allocation3 + $0x70] sm:$0xff]
          %v826 = vld [vmem:[#allocation3 + $0x78] sm:$0xff]
          %v827 = vlog2.pop %v811
          %v828 = vmul.f32 %v827, 0.6931472
          %v829 = vlog2.pop %v812
          %v830 = vmul.f32 %v829, 0.6931472
          %v831 = vlog2.pop %v813
          %v832 = vmul.f32 %v831, 0.6931472
          %v833 = vlog2.pop %v814
          %v834 = vmul.f32 %v833, 0.6931472
          %v835 = vlog2.pop %v815
          %v836 = vmul.f32 %v835, 0.6931472
          %v837 = vlog2.pop %v816
          %v838 = vmul.f32 %v837, 0.6931472
          %v839 = vlog2.pop %v817
          %v840 = vmul.f32 %v839, 0.6931472
          %v841 = vlog2.pop %v818
          %v842 = vmul.f32 %v841, 0.6931472
          %v843 = vlog2.pop %v819
          %v844 = vmul.f32 %v843, 0.6931472
          %v845 = vlog2.pop %v820
          %v846 = vmul.f32 %v845, 0.6931472
          %v847 = vlog2.pop %v821
          %v848 = vmul.f32 %v847, 0.6931472
          %v849 = vlog2.pop %v822
          %v850 = vmul.f32 %v849, 0.6931472
          %v851 = vlog2.pop %v823
          %v852 = vmul.f32 %v851, 0.6931472
          %v853 = vlog2.pop %v824
          %v854 = vmul.f32 %v853, 0.6931472
          %v855 = vlog2.pop %v825
          %v856 = vmul.f32 %v855, 0.6931472
          %v857 = vlog2.pop %v826
          %v858 = vmul.f32 %v857, 0.6931472
          %v859 = vadd.f32 %v795, %v828
          %v860 = vadd.f32 %v796, %v830
          %v861 = vadd.f32 %v797, %v832
          %v862 = vadd.f32 %v798, %v834
          %v863 = vadd.f32 %v799, %v836
          %v864 = vadd.f32 %v800, %v838
          %v865 = vadd.f32 %v801, %v840
          %v866 = vadd.f32 %v802, %v842
          %v867 = vadd.f32 %v803, %v844
          %v868 = vadd.f32 %v804, %v846
          %v869 = vadd.f32 %v805, %v848
          %v870 = vadd.f32 %v806, %v850
          %v871 = vadd.f32 %v807, %v852
          %v872 = vadd.f32 %v808, %v854
          %v873 = vadd.f32 %v809, %v856
          %v874 = vadd.f32 %v810, %v858
          %875 = vst.msk [vmem:[%s2] sm:$0xff] %vm758, %v859
          %876 = vst.msk [vmem:[%s2 + $0x8] sm:$0xff] %vm758, %v860
          %877 = vst.msk [vmem:[%s2 + $0x10] sm:$0xff] %vm758, %v861
          %878 = vst.msk [vmem:[%s2 + $0x18] sm:$0xff] %vm758, %v862
          %879 = vst.msk [vmem:[%s2 + $0x20] sm:$0xff] %vm758, %v863
          %880 = vst.msk [vmem:[%s2 + $0x28] sm:$0xff] %vm758, %v864
          %881 = vst.msk [vmem:[%s2 + $0x30] sm:$0xff] %vm758, %v865
          %882 = vst.msk [vmem:[%s2 + $0x38] sm:$0xff] %vm758, %v866
          %883 = vst.msk [vmem:[%s2 + $0x40] sm:$0xff] %vm758, %v867
          %884 = vst.msk [vmem:[%s2 + $0x48] sm:$0xff] %vm758, %v868
          %885 = vst.msk [vmem:[%s2 + $0x50] sm:$0xff] %vm758, %v869
          %886 = vst.msk [vmem:[%s2 + $0x58] sm:$0xff] %vm758, %v870
          %887 = vst.msk [vmem:[%s2 + $0x60] sm:$0xff] %vm758, %v871
          %888 = vst.msk [vmem:[%s2 + $0x68] sm:$0xff] %vm758, %v872
          %889 = vst.msk [vmem:[%s2 + $0x70] sm:$0xff] %vm758, %v873
          %890 = vst.msk [vmem:[%s2 + $0x78] sm:$0xff] %vm758, %v874
        $region77: #{tpu_custom_call.1} parent=64 // pred_fallthru
          _
        // Predicated region
        $region78: #{tpu_custom_call.1} parent=64 // pred_check
          %p891 = pneg %p73
        $region79: #{tpu_custom_call.1} parent=64 // pred_check_branch
          %893 = sbr.rel (%p891) target = $region81
        $region80: #{tpu_custom_call.1} parent=64 // pred_region
          _
        $region81: #{tpu_custom_call.1} parent=64 // pred_fallthru
          _
        // Predicated region
        $region82: #{tpu_custom_call.1} parent=64 // pred_check
          %p894 = pneg %p73
        $region83: #{tpu_custom_call.1} parent=64 // pred_check_branch
          %896 = sbr.rel (%p894) target = $region85
        $region84: #{tpu_custom_call.1} parent=64 // pred_region
          _
        $region85: #{tpu_custom_call.1} parent=64 // pred_fallthru
          _
      $region65: #{tpu_custom_call.1} parent=5 // pred_fallthru
        _
      %p897 = scmp.le.s32.totalorder 2, %s8
      // Predicated region
      $region86: #{tpu_custom_call.1} parent=5 // pred_check
        %p898 = pneg %p897
      $region87: #{tpu_custom_call.1} parent=5 // pred_check_branch
        %900 = sbr.rel (%p898) target = $region89
      $region88: #{tpu_custom_call.1} parent=5 // pred_region
        %s901 = ssub.s32 %s8, 2
      $region89: #{tpu_custom_call.1} parent=5 // pred_fallthru
        _
    $region6: #{tpu_custom_call.1} parent=1 // loop_footer
      %s12 = sadd.s32 1, %s8
    $region7: #{tpu_custom_call.1} parent=1 // loop_footer_branch
      %7 = sbr.rel target = $region3
    $region8: #{tpu_custom_call.1} parent=1 // loop_exit
      _

</llo_original>
